<compile_context>
chip_gen: v7x
topology: tpu7x:2x2x1
jax: 0.10.0
libtpu: 0.0.40
codegen_flags: <defaults>
</compile_context>

<pallas_src>
import jax
import jax.numpy as jnp
from jax.experimental import pallas as pl
from jax.experimental.pallas import tpu as pltpu


_VMEM_LIMIT = 32 * 1024 * 1024  # safe on v5e/v6e (128 MiB) and v7x (64 MiB)


def _disc_out1_kernel(x_ref, w_ref, b_ref, o_ref):
    """OUT == 1: VPU multiply + XLU lane reduction (no MXU).

    x_ref: [TB, IN] (VMEM), w_ref: [1, IN] (VMEM, resident),
    b_ref: [1] (SMEM scalar), o_ref: [TB, 1] (VMEM).
    """
    x = x_ref[...]
    w = w_ref[...]                                    # broadcast over sublanes
    logits = jnp.sum(x * w, axis=-1, keepdims=True)   # [TB, 1], exact f32
    logits = logits + b_ref[0]
    o_ref[...] = jax.nn.sigmoid(logits).astype(o_ref.dtype)


def _disc_dense_kernel(x_ref, w_ref, b_ref, o_ref):
    """Generic OUT > 1 path (MXU matmul).

    x_ref: [TB, IN], w_ref: [IN, OUT] (resident), b_ref: [1, OUT] (resident),
    o_ref: [TB, OUT].
    """
    logits = jnp.dot(x_ref[...], w_ref[...],
                     preferred_element_type=jnp.float32) + b_ref[...]
    o_ref[...] = jax.nn.sigmoid(logits).astype(o_ref.dtype)


def _cost(B, IN, OUT):
    return pl.CostEstimate(
        flops=2 * B * IN * OUT,
        transcendentals=B * OUT,
        bytes_accessed=4 * (B * IN + IN * OUT + B * OUT),
    )


def discriminator_forward(x, w, b, *, block_b=1024):
    """sigmoid(x @ w + b).  x: [B, IN] f32, w: [IN, OUT] f32, b: [OUT] f32."""
    B, IN = x.shape
    OUT = w.shape[1]
    assert block_b % 8 == 0 and block_b >= 8
    cost = _cost(B, IN, OUT)

    # ---------------- OUT > 1: generic dense path (MXU) ----------------
    if OUT != 1:
        b_row = b.reshape(1, OUT)
        if B <= block_b:
            # Small batch: single invocation, whole (bounded-size) arrays in
            # VMEM, no grid machinery.
            return pl.pallas_call(
                _disc_dense_kernel,
                out_shape=jax.ShapeDtypeStruct((B, OUT), x.dtype),
                in_specs=[
                    pl.BlockSpec(memory_space=pltpu.MemorySpace.VMEM),  # x
                    pl.BlockSpec(memory_space=pltpu.MemorySpace.VMEM),  # w
                    pl.BlockSpec(memory_space=pltpu.MemorySpace.VMEM),  # bias
                ],
                out_specs=pl.BlockSpec(memory_space=pltpu.MemorySpace.VMEM),
                compiler_params=pltpu.CompilerParams(
                    vmem_limit_bytes=_VMEM_LIMIT),
                cost_estimate=cost,
            )(x, w, b_row)

        # Large batch: tile the batch axis; w/bias stay resident (constant
        # block index => fetched once, never re-DMA'd), x is double-buffered.
        grid = (pl.cdiv(B, block_b),)
        return pl.pallas_call(
            _disc_dense_kernel,
            out_shape=jax.ShapeDtypeStruct((B, OUT), x.dtype),
            grid=grid,
            in_specs=[
                pl.BlockSpec((block_b, IN), lambda i: (i, 0)),   # x tile
                pl.BlockSpec((IN, OUT), lambda i: (0, 0)),       # w (resident)
                pl.BlockSpec((1, OUT), lambda i: (0, 0)),        # bias
            ],
            out_specs=pl.BlockSpec((block_b, OUT), lambda i: (i, 0)),
            compiler_params=pltpu.CompilerParams(
                dimension_semantics=("parallel",),
                vmem_limit_bytes=_VMEM_LIMIT,
            ),
            cost_estimate=cost,
        )(x, w, b_row)

    # ---------------- OUT == 1: specialized VPU/XLU path ----------------
    w_row = w.reshape(1, IN)      # [IN, 1] -> [1, IN] (tiny, done in XLA)
    b_scalar = b.reshape(1)       # scalar bias lives in SMEM

    if B <= block_b:
        # Tiny batch: single invocation, no grid, no pipeline machinery.
        # x slab <= block_b * IN * 4B = 4 MiB, fits even v5e's 16 MiB scoped
        # default; explicit limit keeps it portable anyway.
        return pl.pallas_call(
            _disc_out1_kernel,
            out_shape=jax.ShapeDtypeStruct((B, 1), x.dtype),
            in_specs=[
                pl.BlockSpec(memory_space=pltpu.MemorySpace.VMEM),   # x
                pl.BlockSpec(memory_space=pltpu.MemorySpace.VMEM),   # w row
                pl.BlockSpec(memory_space=pltpu.MemorySpace.SMEM),   # bias
            ],
            out_specs=pl.BlockSpec(memory_space=pltpu.MemorySpace.VMEM),
            compiler_params=pltpu.CompilerParams(
                vmem_limit_bytes=_VMEM_LIMIT),
            cost_estimate=cost,
        )(x, w_row, b_scalar)

    # Real batch sizes: tile the batch axis (grid >= 2 here by construction,
    # so v7x's two TensorCores can each take a share). x streams HBM->VMEM
    # double-buffered; the 4 KiB w row has a constant (0,0) block index so it
    # is DMA'd once and stays resident; bias is an SMEM scalar.
    grid = (pl.cdiv(B, block_b),)
    return pl.pallas_call(
        _disc_out1_kernel,
        out_shape=jax.ShapeDtypeStruct((B, 1), x.dtype),
        grid=grid,
        in_specs=[
            pl.BlockSpec((block_b, IN), lambda i: (i, 0)),           # x tile
            pl.BlockSpec((1, IN), lambda i: (0, 0)),                 # w row
            pl.BlockSpec(memory_space=pltpu.MemorySpace.SMEM),       # bias
        ],
        out_specs=pl.BlockSpec((block_b, 1), lambda i: (i, 0)),
        compiler_params=pltpu.CompilerParams(
            dimension_semantics=("parallel",),
            vmem_limit_bytes=_VMEM_LIMIT,
        ),
        cost_estimate=cost,
    )(x, w_row, b_scalar)


if __name__ == "__main__":
    key = jax.random.PRNGKey(0)
    k_x, k_w, k_b, k_x2, k_w3, k_b3 = jax.random.split(key, 6)

    IN_DIM, OUT_DIM = 1024, 1  # module: nn.Linear(1024, output_dim=1) + Sigmoid

    # --- Small case (module default): B=8, exercises the grid-free path. ---
    B = 8
    x = jax.random.normal(k_x, (B, IN_DIM), dtype=jnp.float32)
    w = 0.02 * jax.random.normal(k_w, (IN_DIM, OUT_DIM), dtype=jnp.float32)
    b = 0.02 * jax.random.normal(k_b, (OUT_DIM,), dtype=jnp.float32)

    out = jax.block_until_ready(discriminator_forward(x, w, b))
    ref = jax.nn.sigmoid(jnp.dot(x, w, precision="highest") + b[None, :])
    assert out.shape == (B, OUT_DIM)
    assert jnp.allclose(out, ref, atol=1e-5, rtol=1e-5)

    # --- Larger batch: exercises the batch-tiled, "parallel" path (grid=2). ---
    B2 = 2048
    x2 = jax.random.normal(k_x2, (B2, IN_DIM), dtype=jnp.float32)
    out2 = jax.block_until_ready(discriminator_forward(x2, w, b, block_b=1024))
    ref2 = jax.nn.sigmoid(jnp.dot(x2, w, precision="highest") + b[None, :])
    assert out2.shape == (B2, OUT_DIM)
    assert jnp.allclose(out2, ref2, atol=1e-5, rtol=1e-5)

    # --- OUT > 1 fallback: gridless small-batch dense path. ---
    OUT3 = 4
    w3 = 0.02 * jax.random.normal(k_w3, (IN_DIM, OUT3), dtype=jnp.float32)
    b3 = 0.02 * jax.random.normal(k_b3, (OUT3,), dtype=jnp.float32)
    out3 = jax.block_until_ready(discriminator_forward(x, w3, b3))
    ref3 = jax.nn.sigmoid(jnp.dot(x, w3, precision="highest") + b3[None, :])
    assert out3.shape == (B, OUT3)
    assert jnp.allclose(out3, ref3, atol=2e-3, rtol=2e-3)

    # --- OUT > 1 fallback: batch-tiled dense path (fixes the VMEM-OOM risk). ---
    out4 = jax.block_until_ready(discriminator_forward(x2, w3, b3, block_b=1024))
    ref4 = jax.nn.sigmoid(jnp.dot(x2, w3, precision="highest") + b3[None, :])
    assert out4.shape == (B2, OUT3)
    assert jnp.allclose(out4, ref4, atol=2e-3, rtol=2e-3)

    print("KERNEL_OK")
</pallas_src>

<mosaic_0001>
module attributes {stable_mosaic.version = 11 : i64} {
  func.func @_disc_out1_kernel(%arg0: memref<8x1024xf32, #tpu.memory_space<vmem>>, %arg1: memref<1x1024xf32, #tpu.memory_space<vmem>>, %arg2: memref<1xf32, #tpu.memory_space<smem>>, %arg3: memref<8x1xf32, #tpu.memory_space<vmem>>) attributes {dimension_semantics = [], scalar_prefetch = 0 : i64, scratch_operands = 0 : i64, tpu.core_type = #tpu.core_type<tc>} {
    %c0 = arith.constant 0 : index
    %c0_0 = arith.constant 0 : index
    %0 = vector.load %arg0[%c0, %c0_0] : memref<8x1024xf32, #tpu.memory_space<vmem>>, vector<8x1024xf32>
    %c0_1 = arith.constant 0 : index
    %c0_2 = arith.constant 0 : index
    %1 = vector.load %arg1[%c0_1, %c0_2] : memref<1x1024xf32, #tpu.memory_space<vmem>>, vector<1x1024xf32>
    %2 = vector.broadcast %1 : vector<1x1024xf32> to vector<8x1024xf32>
    %3 = arith.mulf %0, %2 : vector<8x1024xf32>
    %cst = arith.constant dense<0.000000e+00> : vector<8xf32>
    %4 = vector.multi_reduction <add>, %3, %cst [1] : vector<8x1024xf32> to vector<8xf32>
    %5 = vector.shape_cast %4 : vector<8xf32> to vector<8x1xf32>
    %c0_3 = arith.constant 0 : index
    %6 = memref.load %arg2[%c0_3] : memref<1xf32, #tpu.memory_space<smem>>
    %7 = vector.broadcast %6 : f32 to vector<8x1xf32>
    %8 = arith.addf %5, %7 : vector<8x1xf32>
    %9 = arith.negf %8 : vector<8x1xf32>
    %10 = math.exp %9 : vector<8x1xf32>
    %cst_4 = arith.constant 1.000000e+00 : f32
    %11 = vector.broadcast %cst_4 : f32 to vector<8x1xf32>
    %12 = arith.addf %11, %10 : vector<8x1xf32>
    %13 = arith.divf %11, %12 : vector<8x1xf32>
    %c0_5 = arith.constant 0 : index
    %c0_6 = arith.constant 0 : index
    %14 = vector.load %arg3[%c0_5, %c0_6] : memref<8x1xf32, #tpu.memory_space<vmem>>, vector<8x1xf32>
    tpu.vector_store %arg3[%c0_5, %c0_6], %13 {strides = array<i32>} : memref<8x1xf32, #tpu.memory_space<vmem>>, vector<8x1xf32>,
    return
  }
}

</mosaic_0001>

<llo_original>
// kernel: tpu_custom_call.1
$region0: #{tpu_custom_call.1}
  #allocation0 [shape = 'u32[]', space=smem, size = 0x4, offset = 0x4, fixed_abs, tag = 'smem constant byte address 0x4 - core index']
  #allocation1 [shape = 'u32[144,128]{1,0:T(1,128)}', space=vmem, size = 0x12000, scoped, tag = 'internal scratch']
  #allocation2 [shape = 'f32[1]{0:T(128)S(6)}', space=smem, size = 0x200, scoped, tag = 'scoped memory for tpu_custom_call.1']
  %s0 = inlined_call_operand.hbm [shape: f32[8,1024], index: 0, kind: input, shape index: {}]
  %s1 = inlined_call_operand.hbm [shape: f32[1,1024], index: 1, kind: input, shape index: {}]
  %s2 = inlined_call_operand.<no memory space> [shape: f32[1], index: 2, kind: input, shape index: {}]
  %s3 = inlined_call_operand.vmem [shape: f32[8,1], index: 3, kind: output, shape index: {}]
  %s4 = sld [smem:[#allocation0]]
  $region30: #{tpu_custom_call.1} parent=0
    _
  %s6 = ssub.s32 1, %s4
  %s7 = scalar_select 0, %s6, %s4
  %8 = sst [smem:[#allocation2]] %s2
  $region1: #{tpu_custom_call.1} parent=0
    #allocation3 [shape = 'u8[32768]{0}', space=vmem, size = 0x8000, scoped, tag = 'input window, operand 0, single buffered']
    #allocation4 [shape = 's32[1]{0}', space=sflag, size = 0x4, scoped, tag = 'scoped memory for tpu_custom_call.1']
    #allocation5 [shape = 'u8[4096]{0}', space=vmem, size = 0x1000, scoped, tag = 'input window, operand 1, single buffered']
    #allocation6 [shape = 's32[1]{0}', space=sflag, size = 0x4, scoped, tag = 'scoped memory for tpu_custom_call.1']
    %9 = vsyncpa [#allocation4], 0
    %10 = vsyncpa [#allocation6], 0
    // Predicated region
    $region2: #{tpu_custom_call.1} parent=1 // pred_check
      _
    $region3: #{tpu_custom_call.1} parent=1 // pred_check_branch
      %12 = sbr.rel (0) target = $region5
    $region4: #{tpu_custom_call.1} parent=1 // pred_region
      %s14 = ssub.s32 1024, 1024
      %15 = vsyncadd [#allocation4], %s14
      %s17 = sshll.u32 [#allocation3], 4
      %s18 = int_to_ptr.vmem [resolvable:$true] %s17
      %20 = dma.hbm_to_vmem [thread:$0]  %s0, 1024, %s18, [#allocation4]
    $region5: #{tpu_custom_call.1} parent=1 // pred_fallthru
      _
    // Predicated region
    $region6: #{tpu_custom_call.1} parent=1 // pred_check
      _
    $region7: #{tpu_custom_call.1} parent=1 // pred_check_branch
      %22 = sbr.rel (0) target = $region9
    $region8: #{tpu_custom_call.1} parent=1 // pred_region
      %s24 = ssub.s32 128, 128
      %25 = vsyncadd [#allocation6], %s24
      %s27 = sshll.u32 [#allocation5], 4
      %s28 = int_to_ptr.vmem [resolvable:$true] %s27
      %30 = dma.hbm_to_vmem [thread:$0]  %s1, 128, %s28, [#allocation6]
    $region9: #{tpu_custom_call.1} parent=1 // pred_fallthru
      _
    // Predicated region
    $region10: #{tpu_custom_call.1} parent=1 // pred_check
      _
    $region11: #{tpu_custom_call.1} parent=1 // pred_check_branch
      %32 = sbr.rel (0) target = $region13
    $region12: #{tpu_custom_call.1} parent=1 // pred_region
      _
    $region13: #{tpu_custom_call.1} parent=1 // pred_fallthru
      _
    // Predicated region
    $region14: #{tpu_custom_call.1} parent=1 // pred_check
      _
    $region15: #{tpu_custom_call.1} parent=1 // pred_check_branch
      %34 = sbr.rel (0) target = $region17
    $region16: #{tpu_custom_call.1} parent=1 // pred_region
      %35 = dma.done [#allocation4], 1024
    $region17: #{tpu_custom_call.1} parent=1 // pred_fallthru
      _
    // Predicated region
    $region18: #{tpu_custom_call.1} parent=1 // pred_check
      _
    $region19: #{tpu_custom_call.1} parent=1 // pred_check_branch
      %37 = sbr.rel (0) target = $region21
    $region20: #{tpu_custom_call.1} parent=1 // pred_region
      %38 = dma.done [#allocation6], 128
    $region21: #{tpu_custom_call.1} parent=1 // pred_fallthru
      _
    %v39 = vld [vmem:[#allocation3] sm:$0xff]
    %v40 = vld [vmem:[#allocation3 + $0x8] sm:$0xff]
    %v41 = vld [vmem:[#allocation3 + $0x10] sm:$0xff]
    %v42 = vld [vmem:[#allocation3 + $0x18] sm:$0xff]
    %v43 = vld [vmem:[#allocation3 + $0x20] sm:$0xff]
    %v44 = vld [vmem:[#allocation3 + $0x28] sm:$0xff]
    %v45 = vld [vmem:[#allocation3 + $0x30] sm:$0xff]
    %v46 = vld [vmem:[#allocation3 + $0x38] sm:$0xff]
    %v47 = vld [vmem:[#allocation5] sm:$0xff]
    %v49 = vlaneseq
    %v50 = vshrl.u32 %v49, 7
    %v51 = vsub.s32 0, %v50
    %v52 = vrot.slane %v47, %v51
    %v53 = vlaneseq
    %v54 = vshrl.u32 %v53, 7
    %v55 = vsub.s32 1, %v54
    %v56 = vrot.slane %v47, %v55
    %v57 = vlaneseq
    %v58 = vshrl.u32 %v57, 7
    %v59 = vsub.s32 2, %v58
    %v60 = vrot.slane %v47, %v59
    %v61 = vlaneseq
    %v62 = vshrl.u32 %v61, 7
    %v63 = vsub.s32 3, %v62
    %v64 = vrot.slane %v47, %v63
    %v65 = vlaneseq
    %v66 = vshrl.u32 %v65, 7
    %v67 = vsub.s32 4, %v66
    %v68 = vrot.slane %v47, %v67
    %v69 = vlaneseq
    %v70 = vshrl.u32 %v69, 7
    %v71 = vsub.s32 5, %v70
    %v72 = vrot.slane %v47, %v71
    %v73 = vlaneseq
    %v74 = vshrl.u32 %v73, 7
    %v75 = vsub.s32 6, %v74
    %v76 = vrot.slane %v47, %v75
    %v77 = vlaneseq
    %v78 = vshrl.u32 %v77, 7
    %v79 = vsub.s32 7, %v78
    %v80 = vrot.slane %v47, %v79
    %v89 = vmul.f32 %v39, %v52
    %v90 = vmul.f32 %v40, %v56
    %v91 = vmul.f32 %v41, %v60
    %v92 = vmul.f32 %v42, %v64
    %v93 = vmul.f32 %v43, %v68
    %v94 = vmul.f32 %v44, %v72
    %v95 = vmul.f32 %v45, %v76
    %v96 = vmul.f32 %v46, %v80
    %v97 = vadd.f32 %v89, %v90
    %v98 = vadd.f32 %v97, %v91
    %v99 = vadd.f32 %v98, %v92
    %v100 = vadd.f32 %v99, %v93
    %v101 = vadd.f32 %v100, %v94
    %v102 = vadd.f32 %v101, %v95
    %v103 = vadd.f32 %v102, %v96
    %104 = vadd.xlane.f32.xlu0 %v103
    %v105 = vpop.xlane.xlu0 %104
    %s106 = sld [smem:[#allocation2]]
    %v107 = vstv %s106
    %v108 = vadd.f32 %v105, %v107
    %v109 = vxor.u32 %v108, 2147483648
    %v110 = vmul.f32 %v109, 1.442695
    %v111 = vpow.pop %v110
    %v112 = vadd.f32 %v111, 1.0
    %v113 = vrcp.pop %v112
    %v114 = vmul.f32 1.0, %v113
    %vm115 = vcmask 7168
    %116 = vst.msk [vmem:[%s3] sm:$0xff] %vm115, %v114
    // Predicated region
    $region22: #{tpu_custom_call.1} parent=1 // pred_check
      _
    $region23: #{tpu_custom_call.1} parent=1 // pred_check_branch
      %118 = sbr.rel (0) target = $region25
    $region24: #{tpu_custom_call.1} parent=1 // pred_region
      _
    $region25: #{tpu_custom_call.1} parent=1 // pred_fallthru
      _
    // Predicated region
    $region26: #{tpu_custom_call.1} parent=1 // pred_check
      _
    $region27: #{tpu_custom_call.1} parent=1 // pred_check_branch
      %120 = sbr.rel (0) target = $region29
    $region28: #{tpu_custom_call.1} parent=1 // pred_region
      _
    $region29: #{tpu_custom_call.1} parent=1 // pred_fallthru
      _
    %121 = vsyncpa [#allocation4], 1
    %122 = vsyncpa [#allocation6], 1

</llo_original>
